<compile_context>
chip_gen: v5e
topology: v5e:2x2
jax: 0.10.0
libtpu: 0.0.40
codegen_flags: <defaults>
</compile_context>

<pallas_src>
import functools

import jax
import jax.numpy as jnp
from jax import lax
from jax.experimental import pallas as pl
from jax.experimental.pallas import tpu as pltpu

_LANES = 128


def _bce_dice_kernel(pred_ref, tgt_ref, bce_ref, num_ref, den_ref, *,
                     block_rows, acc_rows, exponent, ignore_index):
    c = pl.program_id(2)

    @pl.when(c == 0)
    def _init():
        bce_ref[...] = jnp.zeros_like(bce_ref)
        num_ref[...] = jnp.zeros_like(num_ref)
        den_ref[...] = jnp.zeros_like(den_ref)

    x = pred_ref[0].astype(jnp.float32)        # (block_rows, 128) logits
    ti = tgt_ref[0].astype(jnp.int32)          # labels widened once (u8/i16/i32 ok)
    valid = ti != ignore_index
    pos = ti == 1                              # binary labels -> selects, no t-muls
    t = ti.astype(jnp.float32)                 # still needed for the unmasked dice den

    # Transcendentals (EUP slot, which has headroom): exp, log1p, exp.
    e = jnp.exp(-jnp.abs(x))
    lse = jnp.log1p(e)                         # softplus(-|x|)
    p = jnp.exp(jnp.minimum(x, 0.0) - lse)     # == sigmoid(x), no VALU divide

    # BCE straight from logits with a per-pixel select on the binary label:
    #   t==1: -log(p)   = relu(-x) + lse       t==0: -log(1-p) = relu(x) + lse
    # clamped at 100 (PyTorch clamps each log term at -100), then patch the two
    # f32 sigmoid-saturation cases for parity with F.binary_cross_entropy:
    #   p==1 -> 100*(1-t),   p==0 -> 100*t
    bce = jnp.minimum(jnp.maximum(jnp.where(pos, -x, x), 0.0) + lse, 100.0)
    bce = jnp.where(p == 1.0, jnp.where(pos, 0.0, 100.0), bce)
    bce = jnp.where(p == 0.0, jnp.where(pos, 100.0, 0.0), bce)
    bce = jnp.where(valid, bce, 0.0)

    num = jnp.where(pos, p, 0.0)
    # NOTE: den intentionally includes ignore_index pixels (matches mmseg
    # binary_dice_loss, whose denominator is not masked).
    ie = int(exponent) if float(exponent).is_integer() else None
    if ie == 1:
        den = p + t
    elif ie is not None and 2 <= ie <= 4:      # small integer exponent: VPU muls only
        pp, tt = p, t
        for _ in range(ie - 1):
            pp, tt = pp * p, tt * t
        den = pp + tt
    else:                                      # true non-integer exponent
        den = p ** exponent + t ** exponent

    fold = None
    if block_rows != acc_rows:
        # Sublane fold on the otherwise-idle MXU:
        #   partial[a, l] = sum_{j : j % acc_rows == a} vals[j, l]
        # HIGHEST precision keeps ~f32 accuracy for the 2e-5 parity check.
        a_i = lax.broadcasted_iota(jnp.int32, (acc_rows, block_rows), 0)
        j_i = lax.broadcasted_iota(jnp.int32, (acc_rows, block_rows), 1)
        fold = (j_i % acc_rows == a_i).astype(jnp.float32)

    def _acc(ref, vals):
        if fold is not None:
            vals = jnp.dot(fold, vals, preferred_element_type=jnp.float32,
                           precision=lax.Precision.HIGHEST)
        ref[0, 0] += vals

    _acc(bce_ref, bce)
    _acc(num_ref, num)
    _acc(den_ref, den)


def _sublane_pack(dtype):
    """Rows per packed (sublane, lane) tile for this dtype: 8 f32, 16 bf16, 32 u8."""
    return 8 * max(1, 4 // jnp.dtype(dtype).itemsize)


def _pick_block_rows(rows, max_rows, gran):
    """Choose the row-block size; returns (block_rows, padded_rows).

    Whole spatial extent when it fits the per-block budget; otherwise the largest
    divisor of `rows` that is a multiple of `gran` and <= max_rows; otherwise
    (pathological rows, e.g. 8*prime) a fixed gran-multiple block with the input
    padded -- never a monolithic rows-sized block that could blow scoped VMEM.
    """
    if rows <= max_rows:
        return rows, rows
    r = (max_rows // gran) * gran
    while r >= gran:
        if rows % r == 0:
            return r, rows
        r -= gran
    block = max(gran, (max_rows // gran) * gran)
    padded = -(-rows // block) * block
    return block, padded


def _in_spec(block_shape, index_map, buffer_count):
    """Input BlockSpec, with deeper input pipelining when available (v5e item)."""
    if buffer_count and buffer_count > 2 and hasattr(pl, "Buffered"):
        try:
            return pl.BlockSpec(block_shape, index_map,
                                pipeline_mode=pl.Buffered(buffer_count))
        except TypeError:   # jax without BlockSpec(pipeline_mode=...)
            pass
    return pl.BlockSpec(block_shape, index_map)


def bce_dice_loss(pred, target, *, smooth=1.0, exponent=2.0, loss_weight=1.0,
                  loss_multiply=(1.0, 3.0), ignore_index=255,
                  max_block_rows=2048, input_buffers=3):
    """Pallas implementation of BCEDiceLoss.forward. Returns per-sample loss (N,).

    pred:   (N, 1, H, W) logits, float32 or bfloat16 (streamed in native dtype).
    target: (N, H, W) integer labels in {0, 1, ignore_index}; uint8 recommended
            (minimum HBM bytes/pixel). int8 is rejected (255 unrepresentable).
    """
    n, c, h, w = pred.shape
    assert c == 1, "BCEDiceLoss squeezes channel dim 1; expects C == 1"
    assert target.shape == (n, h, w)
    assert jnp.issubdtype(target.dtype, jnp.integer), "target must be integer-typed"
    assert target.dtype != jnp.int8, \
        "int8 targets cannot represent ignore_index=255; use uint8/int16/int32"
    hw = h * w
    assert hw % _LANES == 0, "spatial size must be a multiple of 128"
    rows = hw // _LANES

    gran = max(_sublane_pack(pred.dtype), _sublane_pack(target.dtype))
    block_rows, padded_rows = _pick_block_rows(rows, max_block_rows, gran)
    acc_rows = 8 if block_rows % 8 == 0 else block_rows
    num_chunks = padded_rows // block_rows

    # Lane-dense layout, no host-side dtype casts (bf16 logits / uint8 labels are
    # upcast in-kernel).
    pred3 = pred.reshape(n, rows, _LANES)
    tgt3 = target.reshape(n, rows, _LANES)
    if padded_rows != rows:
        pad = padded_rows - rows
        # Zero-contribution padding: logit -1e30 => sigmoid == 0 (bce = num = p^e = 0),
        # label 0 => t^e = 0 and the (p==0) bce correction = 100*t = 0.
        pred3 = jnp.pad(pred3, ((0, 0), (0, pad), (0, 0)), constant_values=-1e30)
        tgt3 = jnp.pad(tgt3, ((0, 0), (0, pad), (0, 0)), constant_values=0)

    # v7x has two TensorCores fed via 'parallel' grid axes; when the batch alone
    # cannot occupy both (N == 1), split spatial chunks over a second parallel
    # axis so batch-1 still uses the whole chip (harmless on v5e/v6e).
    spatial_par = 2 if (n == 1 and num_chunks >= 2 and num_chunks % 2 == 0) else 1
    chunks_per_p = num_chunks // spatial_par

    kernel = functools.partial(
        _bce_dice_kernel, block_rows=block_rows, acc_rows=acc_rows,
        exponent=float(exponent), ignore_index=int(ignore_index))

    def in_map(b, p, ci):
        return (b, p * chunks_per_p + ci, 0)

    total_steps = n * spatial_par * chunks_per_p
    buffers = input_buffers if total_steps > input_buffers else None
    in_block = (1, block_rows, _LANES)
    out_spec = pl.BlockSpec((1, 1, acc_rows, _LANES), lambda b, p, ci: (b, p, 0, 0))
    part_shape = jax.ShapeDtypeStruct((n, spatial_par, acc_rows, _LANES), jnp.float32)

    bce_part, num_part, den_part = pl.pallas_call(
        kernel,
        out_shape=(part_shape, part_shape, part_shape),
        grid_spec=pltpu.PrefetchScalarGridSpec(
            num_scalar_prefetch=0,
            grid=(n, spatial_par, chunks_per_p),
            in_specs=[_in_spec(in_block, in_map, buffers),
                      _in_spec(in_block, in_map, buffers)],
            out_specs=(out_spec, out_spec, out_spec)),
        compiler_params=pltpu.CompilerParams(
            dimension_semantics=("parallel", "parallel", "arbitrary"),
            vmem_limit_bytes=32 * 1024 * 1024),
    )(pred3, tgt3)

    # Tiny final reductions (N x P x 8 x 128 partials) done once, outside the kernel.
    bce_mean = jnp.sum(bce_part) / jnp.float32(n * hw)   # mean over ALL N*H*W elements
    num = jnp.sum(num_part, axis=(1, 2, 3))              # (N,)
    den = jnp.sum(den_part, axis=(1, 2, 3))              # (N,)
    dice = 1.0 - (2.0 * num + smooth) / (den + smooth)
    m_bce, m_dice = loss_multiply
    return loss_weight * (m_bce * bce_mean + m_dice * dice)


def _reference(pred, target, *, smooth=1.0, exponent=2.0, loss_weight=1.0,
               loss_multiply=(1.0, 3.0), ignore_index=255):
    """Pure-JAX reference mirroring the PyTorch module."""
    p = jax.nn.sigmoid(pred.astype(jnp.float32))[:, 0]      # (N, H, W)
    t = target.astype(jnp.float32)
    valid = (target != ignore_index).astype(jnp.float32)
    log_p = jnp.maximum(jnp.log(p), -100.0)
    log_1mp = jnp.maximum(jnp.log1p(-p), -100.0)
    bce = -(t * log_p + (1.0 - t) * log_1mp)
    bce = jnp.mean(bce * valid)                              # weight_reduce_loss 'mean'
    n = p.shape[0]
    pf, tf, vf = p.reshape(n, -1), t.reshape(n, -1), valid.reshape(n, -1)
    num = jnp.sum(pf * tf * vf, axis=1) * 2.0 + smooth
    den = jnp.sum(pf ** exponent + tf ** exponent, axis=1) + smooth
    dice = 1.0 - num / den
    return loss_weight * (loss_multiply[0] * bce + loss_multiply[1] * dice)


if __name__ == "__main__":
    ks = jax.random.split(jax.random.PRNGKey(0), 8)

    def check(out, ref, name):
        assert out.shape == ref.shape, (name, out.shape, ref.shape)
        assert jnp.allclose(out, ref, rtol=2e-5, atol=2e-5), (name, out, ref)

    # Case 1: tiny image, bf16 logits + uint8 labels, full-extent block,
    # acc_rows == block_rows (no MXU fold), batch-parallel grid only.
    N, H, W = 2, 16, 16
    pred1 = jax.random.normal(ks[0], (N, 1, H, W), dtype=jnp.float32).astype(jnp.bfloat16)
    tgt1 = jax.random.bernoulli(ks[1], 0.5, (N, H, W)).astype(jnp.uint8)
    tgt1 = tgt1.at[:, 0, :4].set(255)                    # exercise the valid mask
    out1 = jax.block_until_ready(bce_dice_loss(pred1, tgt1))
    check(out1, _reference(pred1, tgt1), "case1")

    # Case 2: whole image in one block, block_rows=32 > acc_rows=8 -> MXU sublane fold.
    N2, H2, W2 = 3, 64, 64
    pred2 = jax.random.normal(ks[2], (N2, 1, H2, W2), dtype=jnp.float32)
    tgt2 = jax.random.bernoulli(ks[3], 0.5, (N2, H2, W2)).astype(jnp.uint8)
    tgt2 = tgt2.at[:, :2, :].set(255)
    out2 = jax.block_until_ready(bce_dice_loss(pred2, tgt2))
    check(out2, _reference(pred2, tgt2), "case2")

    # Case 3: multi-chunk streaming (rows=128, block_rows=32 -> 4 chunks), uint8
    # labels at the 32-row packing granularity, Buffered(3) inputs where supported.
    N3, H3, W3 = 2, 128, 128
    pred3 = jax.random.normal(ks[4], (N3, 1, H3, W3), dtype=jnp.float32)
    tgt3 = jax.random.bernoulli(ks[5], 0.5, (N3, H3, W3)).astype(jnp.uint8)
    tgt3 = tgt3.at[:, :1, :].set(255)
    out3 = jax.block_until_ready(bce_dice_loss(pred3, tgt3, max_block_rows=32))
    check(out3, _reference(pred3, tgt3), "case3")

    # Case 4: batch-1 with an awkward spatial extent (rows=15): exercises the
    # zero-contribution padding path and the second 'parallel' axis (P=2).
    N4, H4, W4 = 1, 24, 80
    pred4 = jax.random.normal(ks[6], (N4, 1, H4, W4), dtype=jnp.float32)
    tgt4 = jax.random.bernoulli(ks[7], 0.5, (N4, H4, W4)).astype(jnp.int32)
    tgt4 = tgt4.at[:, 0, :].set(255)
    out4 = jax.block_until_ready(bce_dice_loss(pred4, tgt4, max_block_rows=8))
    check(out4, _reference(pred4, tgt4), "case4")

    print("KERNEL_OK")
</pallas_src>

<mosaic_0001>
module attributes {stable_mosaic.version = 11 : i64} {
  func.func @_bce_dice_kernel(%arg0: i32, %arg1: i32, %arg2: i32, %arg3: memref<1x2x128xbf16, #tpu.memory_space<vmem>>, %arg4: memref<1x2x128xi8, #tpu.memory_space<vmem>>, %arg5: memref<1x1x2x128xf32, #tpu.memory_space<vmem>>, %arg6: memref<1x1x2x128xf32, #tpu.memory_space<vmem>>, %arg7: memref<1x1x2x128xf32, #tpu.memory_space<vmem>>) attributes {dimension_semantics = [#tpu.dimension_semantics<parallel>, #tpu.dimension_semantics<parallel>, #tpu.dimension_semantics<arbitrary>], iteration_bounds = array<i64: 2, 1, 1>, scalar_prefetch = 0 : i64, scratch_operands = 0 : i64, tpu.core_type = #tpu.core_type<tc>, window_params = [{transform_indices = @transform_0, window_bounds = array<i64: 1, 2, 128>}, {transform_indices = @transform_1, window_bounds = array<i64: 1, 2, 128>}, {transform_indices = @transform_2, window_bounds = array<i64: 1, 1, 2, 128>}, {transform_indices = @transform_3, window_bounds = array<i64: 1, 1, 2, 128>}, {transform_indices = @transform_4, window_bounds = array<i64: 1, 1, 2, 128>}]} {
    %c0_i32 = arith.constant 0 : i32
    %0 = arith.cmpi eq, %arg2, %c0_i32 : i32
    %1 = arith.extui %0 : i1 to i32
    %c0_i32_0 = arith.constant 0 : i32
    %2 = arith.cmpi ne, %1, %c0_i32_0 : i32
    scf.if %2 {
      %cst_42 = arith.constant 0.000000e+00 : f32
      %68 = vector.broadcast %cst_42 : f32 to vector<1x1x2x128xf32>
      %c0_43 = arith.constant 0 : index
      %c0_44 = arith.constant 0 : index
      %c0_45 = arith.constant 0 : index
      %c0_46 = arith.constant 0 : index
      %69 = vector.load %arg5[%c0_43, %c0_44, %c0_45, %c0_46] : memref<1x1x2x128xf32, #tpu.memory_space<vmem>>, vector<1x1x2x128xf32>
      tpu.vector_store %arg5[%c0_43, %c0_44, %c0_45, %c0_46], %68 {strides = array<i32>} : memref<1x1x2x128xf32, #tpu.memory_space<vmem>>, vector<1x1x2x128xf32>,
      %cst_47 = arith.constant 0.000000e+00 : f32
      %70 = vector.broadcast %cst_47 : f32 to vector<1x1x2x128xf32>
      %c0_48 = arith.constant 0 : index
      %c0_49 = arith.constant 0 : index
      %c0_50 = arith.constant 0 : index
      %c0_51 = arith.constant 0 : index
      %71 = vector.load %arg6[%c0_48, %c0_49, %c0_50, %c0_51] : memref<1x1x2x128xf32, #tpu.memory_space<vmem>>, vector<1x1x2x128xf32>
      tpu.vector_store %arg6[%c0_48, %c0_49, %c0_50, %c0_51], %70 {strides = array<i32>} : memref<1x1x2x128xf32, #tpu.memory_space<vmem>>, vector<1x1x2x128xf32>,
      %cst_52 = arith.constant 0.000000e+00 : f32
      %72 = vector.broadcast %cst_52 : f32 to vector<1x1x2x128xf32>
      %c0_53 = arith.constant 0 : index
      %c0_54 = arith.constant 0 : index
      %c0_55 = arith.constant 0 : index
      %c0_56 = arith.constant 0 : index
      %73 = vector.load %arg7[%c0_53, %c0_54, %c0_55, %c0_56] : memref<1x1x2x128xf32, #tpu.memory_space<vmem>>, vector<1x1x2x128xf32>
      tpu.vector_store %arg7[%c0_53, %c0_54, %c0_55, %c0_56], %72 {strides = array<i32>} : memref<1x1x2x128xf32, #tpu.memory_space<vmem>>, vector<1x1x2x128xf32>,
    } else {
    }
    %c0 = arith.constant 0 : index
    %c0_1 = arith.constant 0 : index
    %c0_2 = arith.constant 0 : index
    %3 = vector.load %arg3[%c0, %c0_1, %c0_2] : memref<1x2x128xbf16, #tpu.memory_space<vmem>>, vector<1x2x128xbf16>
    %4 = vector.shape_cast %3 : vector<1x2x128xbf16> to vector<2x128xbf16>
    %5 = arith.extf %4 : vector<2x128xbf16> to vector<2x128xf32>
    %c0_3 = arith.constant 0 : index
    %c0_4 = arith.constant 0 : index
    %c0_5 = arith.constant 0 : index
    %6 = vector.load %arg4[%c0_3, %c0_4, %c0_5] : memref<1x2x128xi8, #tpu.memory_space<vmem>>, vector<1x2x128xi8>
    %7 = vector.shape_cast %6 : vector<1x2x128xi8> to vector<2x128xi8>
    %8 = arith.extui %7 : vector<2x128xi8> to vector<2x128xi32>
    %c255_i32 = arith.constant 255 : i32
    %9 = vector.broadcast %c255_i32 : i32 to vector<2x128xi32>
    %10 = arith.cmpi ne, %8, %9 : vector<2x128xi32>
    %c1_i32 = arith.constant 1 : i32
    %11 = vector.broadcast %c1_i32 : i32 to vector<2x128xi32>
    %12 = arith.cmpi eq, %8, %11 : vector<2x128xi32>
    %13 = arith.sitofp %8 : vector<2x128xi32> to vector<2x128xf32>
    %14 = math.absf %5 : vector<2x128xf32>
    %cst = arith.constant 0.000000e+00 : f32
    %15 = vector.broadcast %cst : f32 to vector<2x128xf32>
    %16 = arith.subf %15, %14 : vector<2x128xf32>
    %17 = math.exp %16 : vector<2x128xf32>
    %18 = math.log1p %17 : vector<2x128xf32>
    %cst_6 = arith.constant 0.000000e+00 : f32
    %19 = vector.broadcast %cst_6 : f32 to vector<2x128xf32>
    %20 = arith.minimumf %5, %19 : vector<2x128xf32>
    %21 = arith.subf %20, %18 : vector<2x128xf32>
    %22 = math.exp %21 : vector<2x128xf32>
    %cst_7 = arith.constant 0.000000e+00 : f32
    %23 = vector.broadcast %cst_7 : f32 to vector<2x128xf32>
    %24 = arith.subf %23, %5 : vector<2x128xf32>
    %25 = arith.select %12, %24, %5 : vector<2x128xi1>, vector<2x128xf32>
    %cst_8 = arith.constant 0.000000e+00 : f32
    %26 = vector.broadcast %cst_8 : f32 to vector<2x128xf32>
    %27 = arith.maximumf %25, %26 : vector<2x128xf32>
    %28 = arith.addf %27, %18 : vector<2x128xf32>
    %cst_9 = arith.constant 1.000000e+02 : f32
    %29 = vector.broadcast %cst_9 : f32 to vector<2x128xf32>
    %30 = arith.minimumf %28, %29 : vector<2x128xf32>
    %cst_10 = arith.constant 1.000000e+00 : f32
    %31 = vector.broadcast %cst_10 : f32 to vector<2x128xf32>
    %32 = arith.cmpf oeq, %22, %31 : vector<2x128xf32>
    %cst_11 = arith.constant 0.000000e+00 : f32
    %cst_12 = arith.constant 1.000000e+02 : f32
    %33 = vector.broadcast %cst_11 : f32 to vector<2x128xf32>
    %34 = vector.broadcast %cst_12 : f32 to vector<2x128xf32>
    %35 = arith.select %12, %33, %34 : vector<2x128xi1>, vector<2x128xf32>
    %36 = arith.select %32, %35, %30 : vector<2x128xi1>, vector<2x128xf32>
    %cst_13 = arith.constant 0.000000e+00 : f32
    %37 = vector.broadcast %cst_13 : f32 to vector<2x128xf32>
    %38 = arith.cmpf oeq, %22, %37 : vector<2x128xf32>
    %cst_14 = arith.constant 1.000000e+02 : f32
    %cst_15 = arith.constant 0.000000e+00 : f32
    %39 = vector.broadcast %cst_14 : f32 to vector<2x128xf32>
    %40 = vector.broadcast %cst_15 : f32 to vector<2x128xf32>
    %41 = arith.select %12, %39, %40 : vector<2x128xi1>, vector<2x128xf32>
    %42 = arith.select %38, %41, %36 : vector<2x128xi1>, vector<2x128xf32>
    %cst_16 = arith.constant 0.000000e+00 : f32
    %43 = vector.broadcast %cst_16 : f32 to vector<2x128xf32>
    %44 = arith.select %10, %42, %43 : vector<2x128xi1>, vector<2x128xf32>
    %cst_17 = arith.constant 0.000000e+00 : f32
    %45 = vector.broadcast %cst_17 : f32 to vector<2x128xf32>
    %46 = arith.select %12, %22, %45 : vector<2x128xi1>, vector<2x128xf32>
    %47 = arith.mulf %22, %22 : vector<2x128xf32>
    %48 = arith.mulf %13, %13 : vector<2x128xf32>
    %49 = arith.addf %47, %48 : vector<2x128xf32>
    %c0_18 = arith.constant 0 : index
    %c0_19 = arith.constant 0 : index
    %c0_20 = arith.constant 0 : index
    %c0_21 = arith.constant 0 : index
    %50 = vector.load %arg5[%c0_18, %c0_19, %c0_20, %c0_21] : memref<1x1x2x128xf32, #tpu.memory_space<vmem>>, vector<1x1x2x128xf32>
    %51 = vector.shape_cast %50 : vector<1x1x2x128xf32> to vector<2x128xf32>
    %52 = arith.addf %51, %44 : vector<2x128xf32>
    %c0_22 = arith.constant 0 : index
    %c0_23 = arith.constant 0 : index
    %c0_24 = arith.constant 0 : index
    %c0_25 = arith.constant 0 : index
    %53 = vector.load %arg5[%c0_22, %c0_23, %c0_24, %c0_25] : memref<1x1x2x128xf32, #tpu.memory_space<vmem>>, vector<1x1x2x128xf32>
    %54 = vector.shape_cast %53 : vector<1x1x2x128xf32> to vector<2x128xf32>
    %55 = vector.shape_cast %52 : vector<2x128xf32> to vector<1x1x2x128xf32>
    tpu.vector_store %arg5[%c0_22, %c0_23, %c0_24, %c0_25], %55 {strides = array<i32>} : memref<1x1x2x128xf32, #tpu.memory_space<vmem>>, vector<1x1x2x128xf32>,
    %c0_26 = arith.constant 0 : index
    %c0_27 = arith.constant 0 : index
    %c0_28 = arith.constant 0 : index
    %c0_29 = arith.constant 0 : index
    %56 = vector.load %arg6[%c0_26, %c0_27, %c0_28, %c0_29] : memref<1x1x2x128xf32, #tpu.memory_space<vmem>>, vector<1x1x2x128xf32>
    %57 = vector.shape_cast %56 : vector<1x1x2x128xf32> to vector<2x128xf32>
    %58 = arith.addf %57, %46 : vector<2x128xf32>
    %c0_30 = arith.constant 0 : index
    %c0_31 = arith.constant 0 : index
    %c0_32 = arith.constant 0 : index
    %c0_33 = arith.constant 0 : index
    %59 = vector.load %arg6[%c0_30, %c0_31, %c0_32, %c0_33] : memref<1x1x2x128xf32, #tpu.memory_space<vmem>>, vector<1x1x2x128xf32>
    %60 = vector.shape_cast %59 : vector<1x1x2x128xf32> to vector<2x128xf32>
    %61 = vector.shape_cast %58 : vector<2x128xf32> to vector<1x1x2x128xf32>
    tpu.vector_store %arg6[%c0_30, %c0_31, %c0_32, %c0_33], %61 {strides = array<i32>} : memref<1x1x2x128xf32, #tpu.memory_space<vmem>>, vector<1x1x2x128xf32>,
    %c0_34 = arith.constant 0 : index
    %c0_35 = arith.constant 0 : index
    %c0_36 = arith.constant 0 : index
    %c0_37 = arith.constant 0 : index
    %62 = vector.load %arg7[%c0_34, %c0_35, %c0_36, %c0_37] : memref<1x1x2x128xf32, #tpu.memory_space<vmem>>, vector<1x1x2x128xf32>
    %63 = vector.shape_cast %62 : vector<1x1x2x128xf32> to vector<2x128xf32>
    %64 = arith.addf %63, %49 : vector<2x128xf32>
    %c0_38 = arith.constant 0 : index
    %c0_39 = arith.constant 0 : index
    %c0_40 = arith.constant 0 : index
    %c0_41 = arith.constant 0 : index
    %65 = vector.load %arg7[%c0_38, %c0_39, %c0_40, %c0_41] : memref<1x1x2x128xf32, #tpu.memory_space<vmem>>, vector<1x1x2x128xf32>
    %66 = vector.shape_cast %65 : vector<1x1x2x128xf32> to vector<2x128xf32>
    %67 = vector.shape_cast %64 : vector<2x128xf32> to vector<1x1x2x128xf32>
    tpu.vector_store %arg7[%c0_38, %c0_39, %c0_40, %c0_41], %67 {strides = array<i32>} : memref<1x1x2x128xf32, #tpu.memory_space<vmem>>, vector<1x1x2x128xf32>,
    return
  }
  func.func @transform_0(%arg0: i32, %arg1: i32, %arg2: i32) -> (i32, i32, i32) {
    %c1_i32 = arith.constant 1 : i32
    %0 = arith.muli %arg1, %c1_i32 : i32
    %1 = arith.addi %0, %arg2 : i32
    %c0_i32 = arith.constant 0 : i32
    %c0_i32_0 = arith.constant 0 : i32
    return %arg0, %1, %c0_i32 : i32, i32, i32
  }
  func.func @transform_1(%arg0: i32, %arg1: i32, %arg2: i32) -> (i32, i32, i32) {
    %c1_i32 = arith.constant 1 : i32
    %0 = arith.muli %arg1, %c1_i32 : i32
    %1 = arith.addi %0, %arg2 : i32
    %c0_i32 = arith.constant 0 : i32
    %c0_i32_0 = arith.constant 0 : i32
    return %arg0, %1, %c0_i32 : i32, i32, i32
  }
  func.func @transform_2(%arg0: i32, %arg1: i32, %arg2: i32) -> (i32, i32, i32, i32) {
    %c0_i32 = arith.constant 0 : i32
    %c0_i32_0 = arith.constant 0 : i32
    %c0_i32_1 = arith.constant 0 : i32
    return %arg0, %arg1, %c0_i32, %c0_i32_0 : i32, i32, i32, i32
  }
  func.func @transform_3(%arg0: i32, %arg1: i32, %arg2: i32) -> (i32, i32, i32, i32) {
    %c0_i32 = arith.constant 0 : i32
    %c0_i32_0 = arith.constant 0 : i32
    %c0_i32_1 = arith.constant 0 : i32
    return %arg0, %arg1, %c0_i32, %c0_i32_0 : i32, i32, i32, i32
  }
  func.func @transform_4(%arg0: i32, %arg1: i32, %arg2: i32) -> (i32, i32, i32, i32) {
    %c0_i32 = arith.constant 0 : i32
    %c0_i32_0 = arith.constant 0 : i32
    %c0_i32_1 = arith.constant 0 : i32
    return %arg0, %arg1, %c0_i32, %c0_i32_0 : i32, i32, i32, i32
  }
}

</mosaic_0001>

<llo_original>
// kernel: tpu_custom_call.1
$region0: #{tpu_custom_call.1}
  #allocation0 [shape = 'u32[]', space=smem, size = 0x4, offset = 0x4, fixed_abs, tag = 'smem constant byte address 0x4 - core index']
  #allocation1 [shape = 'u32[72,128]{1,0:T(1,128)}', space=vmem, size = 0x9000, scoped, tag = 'internal scratch']
  %s0 = inlined_call_operand.hbm [shape: bf16[2,2,128], index: 0, kind: input, shape index: {}]
  %s1 = inlined_call_operand.hbm [shape: u8[2,2,128], index: 1, kind: input, shape index: {}]
  %s2 = inlined_call_operand.hbm [shape: f32[2,1,2,128], index: 2, kind: output, shape index: {0}]
  %s3 = inlined_call_operand.hbm [shape: f32[2,1,2,128], index: 3, kind: output, shape index: {1}]
  %s4 = inlined_call_operand.hbm [shape: f32[2,1,2,128], index: 4, kind: output, shape index: {2}]
  %5 = xla_tuple %s2, %s3, %s4
  %s6 = sld [smem:[#allocation0]]
  $region69: #{tpu_custom_call.1} parent=0
    _
  %s8 = ssub.s32 1, %s6
  %s9 = scalar_select 0, %s8, %s6
  $region1: #{tpu_custom_call.1} parent=0
    #allocation2 [shape = 'u8[1024]{0}', space=vmem, size = 0x400, scoped, tag = 'input window, operand 0']
    #allocation3 [shape = 's32[2]{0}', space=sflag, size = 0x8, scoped, tag = 'scoped memory for tpu_custom_call.1']
    #allocation4 [shape = 's32[2]{0}', space=sflag, size = 0x8, scoped, tag = 'scoped memory for tpu_custom_call.1']
    #allocation5 [shape = 'u8[1024]{0}', space=vmem, size = 0x400, scoped, tag = 'input window, operand 1']
    #allocation6 [shape = 's32[2]{0}', space=sflag, size = 0x8, scoped, tag = 'scoped memory for tpu_custom_call.1']
    #allocation7 [shape = 'u8[2048]{0}', space=vmem, size = 0x800, scoped, tag = 'output window, operand 0']
    #allocation8 [shape = 'u8[2048]{0}', space=vmem, size = 0x800, scoped, tag = 'output window, operand 1']
    #allocation9 [shape = 's32[2]{0}', space=sflag, size = 0x8, scoped, tag = 'scoped memory for tpu_custom_call.1']
    #allocation10 [shape = 'u8[2048]{0}', space=vmem, size = 0x800, scoped, tag = 'output window, operand 2']
    %10 = vsyncpa [#allocation3], 0
    %s11 = scalar_lea.sflag [#allocation3], 1
    %12 = vsyncpa %s11, 0
    %13 = vsyncpa [#allocation6], 0
    %s14 = scalar_lea.sflag [#allocation6], 1
    %15 = vsyncpa %s14, 0
    %16 = vsyncpa [#allocation4], 0
    %s17 = scalar_lea.sflag [#allocation4], 1
    %18 = vsyncpa %s17, 0
    %19 = vsyncpa [#allocation9], 0
    %s20 = scalar_lea.sflag [#allocation9], 1
    %21 = vsyncpa %s20, 0
    loop: start=0, step=1, limit=4
    $region2: #{tpu_custom_call.1} parent=1 // loop_pre_header
      _
    $region3: #{tpu_custom_call.1} parent=1 // loop_header
      %s23 = sphi 0, %s27
      %p24 = scmp.ge.s32.totalorder %s23, 4
      %s30 = sphi 0, %s49
      %s31 = sphi 0, %s45
      %s32 = sphi 0, %s41
      %s33 = sphi 0, %s30
      %s34 = sphi 0, %s31
      %s35 = sphi 0, %s32
      %s36 = sphi 0, %s33
      %s37 = sphi 0, %s34
      %s38 = sphi 0, %s35
      %s56 = sphi 0, %s58
      %s59 = sphi 0, %s56
      %s60 = sphi 0, %s59
      %s76 = sphi 0, %s60
      %s86 = sphi 0, %s88
      %s89 = sphi 0, %s86
      %s90 = sphi 0, %s89
      %s106 = sphi 0, %s90
      %s114 = sphi 0, %s116
      %s117 = sphi 0, %s114
      %s118 = sphi 0, %s117
      %s134 = sphi 0, %s118
      %s142 = sphi 0, %s144
      %s145 = sphi 0, %s142
      %s146 = sphi 0, %s145
      %s162 = sphi 0, %s146
      %s170 = sphi 0, %s172
      %s173 = sphi 0, %s170
      %s174 = sphi 0, %s173
      %s190 = sphi 0, %s174
    $region4: #{tpu_custom_call.1} parent=1 // loop_header_branch
      %26 = sbr.rel (%p24) target = $region8
    $region5: #{tpu_custom_call.1} parent=1 // loop_body
      %s28 = ssub.s32 %s23, 1
      %s29 = ssub.s32 %s23, 2
      %s39 = sadd.s32 1, %s32
      %p40 = scmp.ge.s32.totalorder %s39, 1
      %s41 = scalar_select %p40, 0, %s39
      %s42 = sadd.s32 1, %s31
      %s43 = scalar_select %p40, %s42, %s31
      %p44 = scmp.ge.s32.totalorder %s43, 1
      %s45 = scalar_select %p44, 0, %s43
      %s46 = sadd.s32 1, %s30
      %s47 = scalar_select %p44, %s46, %s30
      %p48 = scmp.ge.s32.totalorder %s47, 2
      %s49 = scalar_select %p48, 0, %s47
      %s50 = sadd.s32 %s31, %s32
      %s51 = sadd.s32 %s45, %s41
      %s52 = ssub.s32 %s30, %s49
      %s53 = ssub.s32 %s50, %s51
      %s54 = sor.u32 %s52, %s53
      %p55 = scmp.eq.s32.totalorder %s54, 0
      %s57 = sadd.s32 %s56, 1
      %s58 = scalar_select %p55, %s56, %s57
      %p61 = pneg %p55
      %p62 = scmp.eq.s32.totalorder %s23, 1
      %p63 = por %p61, %p62
      %p64 = scmp.ne.s32.totalorder %s56, %s59
      %p65 = scmp.eq.s32.totalorder %s23, 0
      %p66 = por %p64, %p65
      %p67 = scmp.ne.s32.totalorder %s56, %s59
      %p68 = scmp.eq.s32.totalorder %s28, 1
      %p69 = por %p67, %p68
      %p70 = scmp.ne.s32.totalorder %s59, %s60
      %p71 = scmp.eq.s32.totalorder %s28, 0
      %p72 = por %p70, %p71
      %p73 = scmp.ne.s32.totalorder %s59, %s60
      %p74 = scmp.eq.s32.totalorder %s29, 1
      %p75 = por %p73, %p74
      %p77 = scmp.ne.s32.totalorder %s60, %s76
      %p78 = scmp.eq.s32.totalorder %s29, 0
      %p79 = por %p77, %p78
      %s80 = sadd.s32 %s31, %s32
      %s81 = sadd.s32 %s45, %s41
      %s82 = ssub.s32 %s30, %s49
      %s83 = ssub.s32 %s80, %s81
      %s84 = sor.u32 %s82, %s83
      %p85 = scmp.eq.s32.totalorder %s84, 0
      %s87 = sadd.s32 %s86, 1
      %s88 = scalar_select %p85, %s86, %s87
      %p91 = pneg %p85
      %p92 = scmp.eq.s32.totalorder %s23, 1
      %p93 = por %p91, %p92
      %p94 = scmp.ne.s32.totalorder %s86, %s89
      %p95 = scmp.eq.s32.totalorder %s23, 0
      %p96 = por %p94, %p95
      %p97 = scmp.ne.s32.totalorder %s86, %s89
      %p98 = scmp.eq.s32.totalorder %s28, 1
      %p99 = por %p97, %p98
      %p100 = scmp.ne.s32.totalorder %s89, %s90
      %p101 = scmp.eq.s32.totalorder %s28, 0
      %p102 = por %p100, %p101
      %p103 = scmp.ne.s32.totalorder %s89, %s90
      %p104 = scmp.eq.s32.totalorder %s29, 1
      %p105 = por %p103, %p104
      %p107 = scmp.ne.s32.totalorder %s90, %s106
      %p108 = scmp.eq.s32.totalorder %s29, 0
      %p109 = por %p107, %p108
      %s110 = ssub.s32 %s30, %s49
      %s111 = ssub.s32 %s31, %s45
      %s112 = sor.u32 %s110, %s111
      %p113 = scmp.eq.s32.totalorder %s112, 0
      %s115 = sadd.s32 %s114, 1
      %s116 = scalar_select %p113, %s114, %s115
      %p119 = pneg %p113
      %p120 = scmp.eq.s32.totalorder %s23, 1
      %p121 = por %p119, %p120
      %p122 = scmp.ne.s32.totalorder %s114, %s117
      %p123 = scmp.eq.s32.totalorder %s23, 0
      %p124 = por %p122, %p123
      %p125 = scmp.ne.s32.totalorder %s114, %s117
      %p126 = scmp.eq.s32.totalorder %s28, 1
      %p127 = por %p125, %p126
      %p128 = scmp.ne.s32.totalorder %s117, %s118
      %p129 = scmp.eq.s32.totalorder %s28, 0
      %p130 = por %p128, %p129
      %p131 = scmp.ne.s32.totalorder %s117, %s118
      %p132 = scmp.eq.s32.totalorder %s29, 1
      %p133 = por %p131, %p132
      %p135 = scmp.ne.s32.totalorder %s118, %s134
      %p136 = scmp.eq.s32.totalorder %s29, 0
      %p137 = por %p135, %p136
      %s138 = ssub.s32 %s30, %s49
      %s139 = ssub.s32 %s31, %s45
      %s140 = sor.u32 %s138, %s139
      %p141 = scmp.eq.s32.totalorder %s140, 0
      %s143 = sadd.s32 %s142, 1
      %s144 = scalar_select %p141, %s142, %s143
      %p147 = pneg %p141
      %p148 = scmp.eq.s32.totalorder %s23, 1
      %p149 = por %p147, %p148
      %p150 = scmp.ne.s32.totalorder %s142, %s145
      %p151 = scmp.eq.s32.totalorder %s23, 0
      %p152 = por %p150, %p151
      %p153 = scmp.ne.s32.totalorder %s142, %s145
      %p154 = scmp.eq.s32.totalorder %s28, 1
      %p155 = por %p153, %p154
      %p156 = scmp.ne.s32.totalorder %s145, %s146
      %p157 = scmp.eq.s32.totalorder %s28, 0
      %p158 = por %p156, %p157
      %p159 = scmp.ne.s32.totalorder %s145, %s146
      %p160 = scmp.eq.s32.totalorder %s29, 1
      %p161 = por %p159, %p160
      %p163 = scmp.ne.s32.totalorder %s146, %s162
      %p164 = scmp.eq.s32.totalorder %s29, 0
      %p165 = por %p163, %p164
      %s166 = ssub.s32 %s30, %s49
      %s167 = ssub.s32 %s31, %s45
      %s168 = sor.u32 %s166, %s167
      %p169 = scmp.eq.s32.totalorder %s168, 0
      %s171 = sadd.s32 %s170, 1
      %s172 = scalar_select %p169, %s170, %s171
      %p175 = pneg %p169
      %p176 = scmp.eq.s32.totalorder %s23, 1
      %p177 = por %p175, %p176
      %p178 = scmp.ne.s32.totalorder %s170, %s173
      %p179 = scmp.eq.s32.totalorder %s23, 0
      %p180 = por %p178, %p179
      %p181 = scmp.ne.s32.totalorder %s170, %s173
      %p182 = scmp.eq.s32.totalorder %s28, 1
      %p183 = por %p181, %p182
      %p184 = scmp.ne.s32.totalorder %s173, %s174
      %p185 = scmp.eq.s32.totalorder %s28, 0
      %p186 = por %p184, %p185
      %p187 = scmp.ne.s32.totalorder %s173, %s174
      %p188 = scmp.eq.s32.totalorder %s29, 1
      %p189 = por %p187, %p188
      %p191 = scmp.ne.s32.totalorder %s174, %s190
      %p192 = scmp.eq.s32.totalorder %s29, 0
      %p193 = por %p191, %p192
      %p194 = scmp.le.s32.totalorder 1, %s23
      %p195 = scmp.lt.s32.totalorder %s23, 3
      %p196 = pnand %p194, %p195
      %p197 = pneg %p196
      // Predicated region
      $region9: #{tpu_custom_call.1} parent=5 // pred_check
        _
      $region10: #{tpu_custom_call.1} parent=5 // pred_check_branch
        %199 = sbr.rel (%p196) target = $region12
      $region11: #{tpu_custom_call.1} parent=5 // pred_region
        %s200 = ssub.s32 %s23, 1
      $region12: #{tpu_custom_call.1} parent=5 // pred_fallthru
        _
      %p201 = scmp.lt.s32.totalorder %s23, 2
      // Predicated region
      $region13: #{tpu_custom_call.1} parent=5 // pred_check
        %p202 = pneg %p201
      $region14: #{tpu_custom_call.1} parent=5 // pred_check_branch
        %204 = sbr.rel (%p202) target = $region16
      $region15: #{tpu_custom_call.1} parent=5 // pred_region
        // Predicated region
        $region17: #{tpu_custom_call.1} parent=15 // pred_check
          %p205 = pneg %p66
        $region18: #{tpu_custom_call.1} parent=15 // pred_check_branch
          %207 = sbr.rel (%p205) target = $region20
        $region19: #{tpu_custom_call.1} parent=15 // pred_region
          %s208 = sand.u32 %s56, 1
          %s209 = scalar_lea.sflag [#allocation3], %s208
          %s210 = sand.u32 %s56, 1
          %s211 = scalar_lea.vmem [#allocation2], %s210
          %s212 = sadd.s32 %s31, %s32
          %214 = vsyncadd %s209, 0
          %s215 = sadd.s32 %s212, %s30
          %s216 = scalar_lea.hbm %s0, %s215
          %s218 = sshll.u32 %s216, 4
          %s219 = int_to_ptr.hbm [resolvable:$true] %s218
          %s220 = sshll.u32 %s211, 4
          %s221 = int_to_ptr.vmem [resolvable:$true] %s220
          %223 = dma.hbm_to_vmem [thread:$0]  %s219, 16, %s221, %s209
        $region20: #{tpu_custom_call.1} parent=15 // pred_fallthru
          _
        // Predicated region
        $region21: #{tpu_custom_call.1} parent=15 // pred_check
          %p224 = pneg %p96
        $region22: #{tpu_custom_call.1} parent=15 // pred_check_branch
          %226 = sbr.rel (%p224) target = $region24
        $region23: #{tpu_custom_call.1} parent=15 // pred_region
          %s227 = sand.u32 %s86, 1
          %s228 = scalar_lea.sflag [#allocation6], %s227
          %s229 = sand.u32 %s86, 1
          %s230 = scalar_lea.vmem [#allocation5], %s229
          %s231 = sadd.s32 %s31, %s32
          %233 = vsyncadd %s228, 0
          %s234 = sadd.s32 %s231, %s30
          %s235 = scalar_lea.hbm %s1, %s234
          %s237 = sshll.u32 %s235, 4
          %s238 = int_to_ptr.hbm [resolvable:$true] %s237
          %s239 = sshll.u32 %s230, 4
          %s240 = int_to_ptr.vmem [resolvable:$true] %s239
          %242 = dma.hbm_to_vmem [thread:$0]  %s238, 16, %s240, %s228
        $region24: #{tpu_custom_call.1} parent=15 // pred_fallthru
          _
      $region16: #{tpu_custom_call.1} parent=5 // pred_fallthru
        _
      %p243 = scmp.le.s32.totalorder 1, %s23
      %p244 = scmp.lt.s32.totalorder %s23, 3
      %p245 = pnand %p243, %p244
      %p246 = pneg %p245
      // Predicated region
      $region25: #{tpu_custom_call.1} parent=5 // pred_check
        _
      $region26: #{tpu_custom_call.1} parent=5 // pred_check_branch
        %248 = sbr.rel (%p245) target = $region28
      $region27: #{tpu_custom_call.1} parent=5 // pred_region
        %s249 = ssub.s32 %s23, 1
        %s250 = sand.u32 %s59, 1
        %s251 = scalar_lea.sflag [#allocation3], %s250
        %s252 = sand.u32 %s59, 1
        %s253 = scalar_lea.vmem [#allocation2], %s252
        // Predicated region
        $region29: #{tpu_custom_call.1} parent=27 // pred_check
          %p254 = pneg %p72
        $region30: #{tpu_custom_call.1} parent=27 // pred_check_branch
          %256 = sbr.rel (%p254) target = $region32
        $region31: #{tpu_custom_call.1} parent=27 // pred_region
          %258 = dma.done %s251, 16
        $region32: #{tpu_custom_call.1} parent=27 // pred_fallthru
          _
        %s259 = sand.u32 %s89, 1
        %s260 = scalar_lea.sflag [#allocation6], %s259
        %s261 = sand.u32 %s89, 1
        %s262 = scalar_lea.vmem [#allocation5], %s261
        // Predicated region
        $region33: #{tpu_custom_call.1} parent=27 // pred_check
          %p263 = pneg %p102
        $region34: #{tpu_custom_call.1} parent=27 // pred_check_branch
          %265 = sbr.rel (%p263) target = $region36
        $region35: #{tpu_custom_call.1} parent=27 // pred_region
          %267 = dma.done %s260, 16
        $region36: #{tpu_custom_call.1} parent=27 // pred_fallthru
          _
        %s268 = sand.u32 %s59, 1
        %s269 = scalar_lea.sflag [#allocation3], %s268
        %s270 = sand.u32 %s59, 1
        %s271 = scalar_lea.vmem [#allocation2], %s270
        %p272 = pneg %p72
        %p273 = pneg %p69
        %s274 = sand.u32 %s89, 1
        %s275 = scalar_lea.sflag [#allocation6], %s274
        %s276 = sand.u32 %s89, 1
        %s277 = scalar_lea.vmem [#allocation5], %s276
        %p278 = pneg %p102
        %p279 = pneg %p99
        %p280 = pneg %p130
        %p281 = pneg %p127
        %s282 = sand.u32 %s117, 1
        %s283 = scalar_lea.sflag [#allocation4], %s282
        %s284 = sand.u32 %s117, 1
        %s285 = smul.addr %s284, 2
        %s286 = scalar_lea.vmem [#allocation7], %s285
        %p287 = pneg %p158
        %p288 = pneg %p155
        %s289 = sand.u32 %s28, 1
        %s290 = scalar_lea.sflag [#allocation9], %s289
        %s291 = sand.u32 %s145, 1
        %s292 = smul.addr %s291, 2
        %s293 = scalar_lea.vmem [#allocation8], %s292
        %p294 = pneg %p186
        %p295 = pneg %p183
        %s296 = sand.u32 %s28, 1
        %s297 = scalar_lea.sflag [#allocation9], %s296
        %s298 = sand.u32 %s173, 1
        %s299 = smul.addr %s298, 2
        %s300 = scalar_lea.vmem [#allocation10], %s299
        %s301 = sadd.s32 %s34, %s35
        %s302 = sadd.s32 %s34, %s35
        %p303 = scmp.eq.s32.totalorder %s35, 0
        // Predicated region
        $region37: #{tpu_custom_call.1} parent=27 // pred_check
          %p304 = pneg %p303
        $region38: #{tpu_custom_call.1} parent=27 // pred_check_branch
          %306 = sbr.rel (%p304) target = $region40
        $region39: #{tpu_custom_call.1} parent=27 // pred_region
          %307 = vst [vmem:[%s286] sm:$0x3] 0.0
          %308 = vst [vmem:[%s293] sm:$0x3] 0.0
          %309 = vst [vmem:[%s300] sm:$0x3] 0.0
        $region40: #{tpu_custom_call.1} parent=27 // pred_fallthru
          _
        %v310 = vld [vmem:[%s253] sm:$0x1]
        %v311 = vunpack.c.l.bf16 %v310
        %v312 = vld [vmem:[%s262] sm:$0x1]
        %v313 = vunpack.c.0.s8 %v312
        %v314 = vand.u32 %v313, 255
        %vm315 = vcmp.ne.s32.totalorder %v314, 255
        %vm316 = vcmp.eq.s32.totalorder %v314, 1
        %v317 = vcvt.s32.f32 %v314
        %v318 = vand.u32 2147483647, %v311
        %v319 = vsub.f32 0.0, %v318
        %v320 = vmul.f32 %v319, 1.442695
        %v321 = vpow.pop %v320
        %v322 = vadd.f32 %v321, 1.0
        %v323 = vlog2.pop %v322
        %v324 = vmul.f32 %v323, 0.6931472
        %v325 = vmul.f32 -0.5, %v321
        %v326 = vadd.f32 %v325, 1.0
        %v327 = vmul.f32 %v326, %v321
        %v328 = vand.u32 2147483647, %v321
        %vm329 = vcmp.lt.f32.partialorder %v328, 0.0004427343
        %v330 = vsel %vm329, %v327, %v324
        %v331 = vmin.f32 %v311, 0.0
        %v332 = vsub.f32 %v331, %v330
        %v333 = vmul.f32 %v332, 1.442695
        %v334 = vpow.pop %v333
        %v335 = vsub.f32 0.0, %v311
        %v336 = vsel %vm316, %v335, %v311
        %v337 = vmax.f32 %v336, 0.0
        %v338 = vadd.f32 %v337, %v330
        %v339 = vmin.f32 %v338, 100.0
        %vm340 = vcmp.eq.f32.partialorder %v334, 1.0
        %v341 = vsel %vm316, 0.0, 100.0
        %v342 = vsel %vm340, %v341, %v339
        %vm343 = vcmp.eq.f32.partialorder %v334, 0.0
        %v344 = vsel %vm316, 100.0, 0.0
        %v345 = vsel %vm343, %v344, %v342
        %v346 = vsel %vm315, %v345, 0.0
        %v347 = vsel %vm316, %v334, 0.0
        %v348 = vmul.f32 %v334, %v334
        %v349 = vmul.f32 %v317, %v317
        %v350 = vadd.f32 %v348, %v349
        %v351 = vld [vmem:[%s286] sm:$0x3]
        %v352 = vadd.f32 %v351, %v346
        %353 = vst [vmem:[%s286] sm:$0x3] %v352
        %v354 = vld [vmem:[%s293] sm:$0x3]
        %v355 = vadd.f32 %v354, %v347
        %356 = vst [vmem:[%s293] sm:$0x3] %v355
        %v357 = vld [vmem:[%s300] sm:$0x3]
        %v358 = vadd.f32 %v357, %v350
        %359 = vst [vmem:[%s300] sm:$0x3] %v358
        %s360 = sand.u32 %s117, 1
        %s361 = scalar_lea.sflag [#allocation4], %s360
        %s362 = sand.u32 %s117, 1
        %s363 = smul.addr %s362, 2
        %s364 = scalar_lea.vmem [#allocation7], %s363
        %s365 = sand.u32 %s28, 1
        %s366 = scalar_lea.sflag [#allocation9], %s365
        %s367 = sand.u32 %s145, 1
        %s368 = smul.addr %s367, 2
        %s369 = scalar_lea.vmem [#allocation8], %s368
        %s370 = sand.u32 %s28, 1
        %s371 = scalar_lea.sflag [#allocation9], %s370
        %s372 = sand.u32 %s173, 1
        %s373 = smul.addr %s372, 2
        %s374 = scalar_lea.vmem [#allocation10], %s373
        // Predicated region
        $region41: #{tpu_custom_call.1} parent=27 // pred_check
          %p375 = pneg %p127
        $region42: #{tpu_custom_call.1} parent=27 // pred_check_branch
          %377 = sbr.rel (%p375) target = $region44
        $region43: #{tpu_custom_call.1} parent=27 // pred_region
          %379 = vsyncadd %s361, 0
          %s380 = sadd.s32 %s34, %s33
          %s381 = smul.addr %s380, 2
          %s382 = scalar_lea.hbm %s2, %s381
          %s384 = sshll.u32 %s364, 4
          %s385 = int_to_ptr.vmem [resolvable:$true] %s384
          %s386 = sshll.u32 %s382, 4
          %s387 = int_to_ptr.hbm [resolvable:$true] %s386
          %389 = dma.vmem_to_hbm [thread:$0]  %s385, 32, %s387, %s361
        $region44: #{tpu_custom_call.1} parent=27 // pred_fallthru
          _
        // Predicated region
        $region45: #{tpu_custom_call.1} parent=27 // pred_check
          %p390 = pneg %p155
        $region46: #{tpu_custom_call.1} parent=27 // pred_check_branch
          %392 = sbr.rel (%p390) target = $region48
        $region47: #{tpu_custom_call.1} parent=27 // pred_region
          %394 = vsyncadd %s366, 0
          %s395 = sadd.s32 %s34, %s33
          %s396 = smul.addr %s395, 2
          %s397 = scalar_lea.hbm %s3, %s396
          %s399 = sshll.u32 %s369, 4
          %s400 = int_to_ptr.vmem [resolvable:$true] %s399
          %s401 = sshll.u32 %s397, 4
          %s402 = int_to_ptr.hbm [resolvable:$true] %s401
          %404 = dma.vmem_to_hbm [thread:$0]  %s400, 32, %s402, %s366
        $region48: #{tpu_custom_call.1} parent=27 // pred_fallthru
          _
        // Predicated region
        $region49: #{tpu_custom_call.1} parent=27 // pred_check
          %p405 = pneg %p183
        $region50: #{tpu_custom_call.1} parent=27 // pred_check_branch
          %407 = sbr.rel (%p405) target = $region52
        $region51: #{tpu_custom_call.1} parent=27 // pred_region
          %409 = vsyncadd %s371, 0
          %s410 = sadd.s32 %s34, %s33
          %s411 = smul.addr %s410, 2
          %s412 = scalar_lea.hbm %s4, %s411
          %s414 = sshll.u32 %s374, 4
          %s415 = int_to_ptr.vmem [resolvable:$true] %s414
          %s416 = sshll.u32 %s412, 4
          %s417 = int_to_ptr.hbm [resolvable:$true] %s416
          %419 = dma.vmem_to_hbm [thread:$0]  %s415, 32, %s417, %s371
        $region52: #{tpu_custom_call.1} parent=27 // pred_fallthru
          _
      $region28: #{tpu_custom_call.1} parent=5 // pred_fallthru
        _
      %p420 = scmp.le.s32.totalorder 2, %s23
      // Predicated region
      $region53: #{tpu_custom_call.1} parent=5 // pred_check
        %p421 = pneg %p420
      $region54: #{tpu_custom_call.1} parent=5 // pred_check_branch
        %423 = sbr.rel (%p421) target = $region56
      $region55: #{tpu_custom_call.1} parent=5 // pred_region
        %s424 = ssub.s32 %s23, 2
        // Predicated region
        $region57: #{tpu_custom_call.1} parent=55 // pred_check
          %p425 = pneg %p133
        $region58: #{tpu_custom_call.1} parent=55 // pred_check_branch
          %427 = sbr.rel (%p425) target = $region60
        $region59: #{tpu_custom_call.1} parent=55 // pred_region
          %s428 = sand.u32 %s118, 1
          %s429 = scalar_lea.sflag [#allocation4], %s428
          %s430 = sand.u32 %s118, 1
          %s431 = smul.addr %s430, 2
          %s432 = scalar_lea.vmem [#allocation7], %s431
          %434 = dma.done %s429, 32
        $region60: #{tpu_custom_call.1} parent=55 // pred_fallthru
          _
        // Predicated region
        $region61: #{tpu_custom_call.1} parent=55 // pred_check
          %p435 = pneg %p161
        $region62: #{tpu_custom_call.1} parent=55 // pred_check_branch
          %437 = sbr.rel (%p435) target = $region64
        $region63: #{tpu_custom_call.1} parent=55 // pred_region
          %s438 = sand.u32 %s29, 1
          %s439 = scalar_lea.sflag [#allocation9], %s438
          %s440 = sand.u32 %s146, 1
          %s441 = smul.addr %s440, 2
          %s442 = scalar_lea.vmem [#allocation8], %s441
          %444 = dma.done %s439, 32
        $region64: #{tpu_custom_call.1} parent=55 // pred_fallthru
          _
        // Predicated region
        $region65: #{tpu_custom_call.1} parent=55 // pred_check
          %p445 = pneg %p189
        $region66: #{tpu_custom_call.1} parent=55 // pred_check_branch
          %447 = sbr.rel (%p445) target = $region68
        $region67: #{tpu_custom_call.1} parent=55 // pred_region
          %s448 = sand.u32 %s29, 1
          %s449 = scalar_lea.sflag [#allocation9], %s448
          %s450 = sand.u32 %s174, 1
          %s451 = smul.addr %s450, 2
          %s452 = scalar_lea.vmem [#allocation10], %s451
          %454 = dma.done %s449, 32
        $region68: #{tpu_custom_call.1} parent=55 // pred_fallthru
          _
      $region56: #{tpu_custom_call.1} parent=5 // pred_fallthru
        _
    $region6: #{tpu_custom_call.1} parent=1 // loop_footer
      %s27 = sadd.s32 1, %s23
    $region7: #{tpu_custom_call.1} parent=1 // loop_footer_branch
      %22 = sbr.rel target = $region3
    $region8: #{tpu_custom_call.1} parent=1 // loop_exit
      _
    %455 = vsyncpa [#allocation3], 1
    %s456 = scalar_lea.sflag [#allocation3], 1
    %457 = vsyncpa %s456, 1
    %458 = vsyncpa [#allocation6], 1
    %s459 = scalar_lea.sflag [#allocation6], 1
    %460 = vsyncpa %s459, 1
    %461 = vsyncpa [#allocation4], 1
    %s462 = scalar_lea.sflag [#allocation4], 1
    %463 = vsyncpa %s462, 1
    %464 = vsyncpa [#allocation9], 1
    %s465 = scalar_lea.sflag [#allocation9], 1
    %466 = vsyncpa %s465, 1

</llo_original>
